<compile_context>
chip_gen: v6e
topology: v6e:2x2x1
jax: 0.10.0
libtpu: 0.0.40
codegen_flags: <defaults>
</compile_context>

<pallas_src>
import functools

import jax
import jax.numpy as jnp
from jax.experimental import pallas as pl
from jax.experimental.pallas import tpu as pltpu


def _round_up(x, m):
    return (x + m - 1) // m * m


def _physical_vmem_bytes():
    """Per-TensorCore VMEM capacity (conservative fallback = v7x 64 MiB)."""
    try:
        return int(pltpu.get_tpu_info().vmem_capacity_bytes)
    except Exception:
        return 64 << 20


def _block_spec(shape, index_map, buffer_count=None):
    """BlockSpec with an optional pipeline buffer-count override (best effort)."""
    if buffer_count is not None and hasattr(pl, "Buffered"):
        try:
            return pl.BlockSpec(shape, index_map,
                                pipeline_mode=pl.Buffered(buffer_count))
        except TypeError:
            pass  # older jax without pipeline_mode: fall back to default
    return pl.BlockSpec(shape, index_map)


def _fused_heads_kernel(x_ref, w_ref, b_ref, o_cls_ref, o_bbox_ref, acc_ref, *,
                        k_out, k_pad, b_out, compute_dtype):
    """Fused matmul for both Fast R-CNN heads (with a D-reduction grid axis).

    x_ref:      (TM, DK)  row/column tile of flattened features (native dtype)
    w_ref:      (DK, P)   fused pre-transposed weight tile [W_cls | 0 | W_bbox | 0]
    b_ref:      (1, P)    fused f32 bias
    o_cls_ref:  (TM, K)   classification logits tile
    o_bbox_ref: (TM, B)   box regression deltas tile
    acc_ref:    (TM, P)   f32 accumulator scratch (resident across the D axis)
    """
    kk = pl.program_id(1)

    @pl.when(kk == 0)
    def _():
        acc_ref[...] = jnp.zeros_like(acc_ref)

    # In-kernel cast (VPU, hidden under MXU/DMA): x is read from HBM exactly
    # once, in its native dtype.
    acc_ref[...] += jnp.dot(x_ref[...].astype(compute_dtype), w_ref[...],
                            preferred_element_type=jnp.float32)

    @pl.when(kk == pl.num_programs(1) - 1)
    def _():
        acc = acc_ref[...] + b_ref[...]          # f32 bias add
        o_cls_ref[...] = acc[:, :k_out].astype(o_cls_ref.dtype)
        o_bbox_ref[...] = acc[:, k_pad:k_pad + b_out].astype(o_bbox_ref.dtype)


def prepare_fused_params(w_cls, b_cls, w_bbox, b_bbox,
                         compute_dtype=jnp.bfloat16):
    """Done ONCE (init time): transpose, concatenate and lane-pad the weights.

    cls columns live in lanes [0, Kpad), bbox columns in [Kpad, Kpad + Bpad)
    with Kpad/Bpad multiples of 128, so both in-kernel output extractions start
    at lane-aligned offsets.

    Returns:
      w_fused: (D, P) compute_dtype, P = Kpad + Bpad
      b_fused: (1, P) float32
      k:       num_classes + 1
      b:       num_bbox_reg_classes * box_dim
    """
    k = int(w_cls.shape[0])
    b = int(w_bbox.shape[0])
    d = int(w_cls.shape[1])
    k_pad = _round_up(max(k, 1), 128)
    b_pad = _round_up(max(b, 1), 128)
    p = k_pad + b_pad

    w_fused = jnp.zeros((d, p), dtype=compute_dtype)
    w_fused = w_fused.at[:, :k].set(jnp.transpose(w_cls).astype(compute_dtype))
    w_fused = w_fused.at[:, k_pad:k_pad + b].set(
        jnp.transpose(w_bbox).astype(compute_dtype))

    b_fused = jnp.zeros((1, p), dtype=jnp.float32)
    b_fused = b_fused.at[0, :k].set(b_cls.astype(jnp.float32))
    b_fused = b_fused.at[0, k_pad:k_pad + b].set(b_bbox.astype(jnp.float32))
    return w_fused, b_fused, k, b


@functools.partial(
    jax.jit,
    static_argnames=("num_cls_out", "num_box_out", "tm", "dk", "out_dtype"))
def fast_rcnn_output_layers(x, w_fused, b_fused, num_cls_out, num_box_out,
                            tm=512, dk=None, out_dtype=jnp.float32):
    """Forward pass of FastRCNNOutputLayers using the fused Pallas kernel.

    Args:
      x:           (N, C, H, W) or (N, D) features (any float dtype).
      w_fused:     (D, P) fused weight from prepare_fused_params.
      b_fused:     (1, P) fused f32 bias.
      num_cls_out: num_classes + 1.
      num_box_out: num_bbox_reg_classes * box_dim.
      tm:          row-tile size over N.
      dk:          optional D-reduction tile (must divide D, multiple of 128);
                   None -> auto (stream the weight only when it is large).
      out_dtype:   output dtype (f32 default; bf16 supported).

    Returns:
      (scores (N, num_cls_out), proposal_deltas (N, num_box_out)) in out_dtype.
    """
    if x.ndim > 2:
        x = x.reshape(x.shape[0], -1)        # == torch.flatten(x, start_dim=1)
    n, d = x.shape
    p = int(w_fused.shape[1])
    compute_dtype = w_fused.dtype
    k_pad = _round_up(max(num_cls_out, 1), 128)
    b_pad = p - k_pad
    assert num_cls_out <= k_pad and num_box_out <= b_pad

    xb = jnp.dtype(x.dtype).itemsize
    cb = jnp.dtype(compute_dtype).itemsize
    ob = jnp.dtype(out_dtype).itemsize

    # ---- D (reduction) tiling: stream the weight only when it is large. ----
    if dk is None:
        dk = d
        if d * p * cb > (8 << 20):           # resident slab too big -> stream
            best = None
            cand = 128
            while cand <= min(d, 1024):
                if d % cand == 0:
                    best = cand
                cand += 128
            if best is not None:
                dk = best
    dk = int(dk)
    if d % dk != 0 or (dk != d and dk % 128 != 0):
        dk = d                               # fall back to a single resident slab
    nk = d // dk

    # ---- N (row) tiling. ----
    row_align = 16 if min(xb, ob) < 4 else 8     # bf16 sublane packing
    tm_eff = min(int(tm), _round_up(n, row_align))
    # v7x megacore: the "parallel" N axis needs >= 2 grid steps to use both TCs.
    while pl.cdiv(n, tm_eff) < 2 and tm_eff > row_align:
        tm_eff = max(row_align, _round_up(tm_eff // 2, row_align))

    # ---- Generation-safe VMEM budgeting. ----
    phys_vmem = _physical_vmem_bytes()
    single_buffer_w = (nk == 1 and d * p * cb > (2 << 20)
                       and hasattr(pl, "Buffered"))

    def vmem_need(tm_i):
        w_bufs = 1 if single_buffer_w else 2
        return (2 * tm_i * dk * xb                  # x tile (double buffered)
                + w_bufs * dk * p * cb              # fused weight
                + p * 4                             # fused bias
                + 2 * tm_i * (k_pad + b_pad) * ob   # two output tiles
                + tm_i * p * 4)                     # f32 accumulator scratch

    budget = phys_vmem - (8 << 20)
    while vmem_need(tm_eff) > budget and tm_eff > row_align:
        tm_eff = max(row_align, _round_up(tm_eff // 2, row_align))

    need = vmem_need(tm_eff)
    vmem_limit = None
    if need > (16 << 20):                    # v5e default scoped limit (16 MiB)
        vmem_limit = int(min(phys_vmem - (2 << 20),
                             max(need + (8 << 20), 32 << 20)))

    grid = (pl.cdiv(n, tm_eff), nk)          # reduction axis last

    kernel = functools.partial(
        _fused_heads_kernel, k_out=num_cls_out, k_pad=k_pad,
        b_out=num_box_out, compute_dtype=compute_dtype)

    flops = 2 * n * d * p
    bytes_accessed = (n * d * xb + d * p * cb + p * 4
                      + n * (num_cls_out + num_box_out) * ob)

    scores, deltas = pl.pallas_call(
        kernel,
        out_shape=(jax.ShapeDtypeStruct((n, num_cls_out), out_dtype),
                   jax.ShapeDtypeStruct((n, num_box_out), out_dtype)),
        grid_spec=pltpu.PrefetchScalarGridSpec(
            num_scalar_prefetch=0,
            grid=grid,
            in_specs=[
                # x row/column tile, native dtype (cast happens in-kernel).
                pl.BlockSpec((tm_eff, dk), lambda i, k: (i, k)),
                # Fused weight: resident (and single-buffered when large).
                _block_spec((dk, p), lambda i, k: (k, 0),
                            buffer_count=1 if single_buffer_w else None),
                # Fused bias: resident across the whole grid.
                _block_spec((1, p), lambda i, k: (0, 0),
                            buffer_count=1 if single_buffer_w else None),
            ],
            out_specs=[
                pl.BlockSpec((tm_eff, num_cls_out), lambda i, k: (i, 0)),
                pl.BlockSpec((tm_eff, num_box_out), lambda i, k: (i, 0)),
            ],
            scratch_shapes=[pltpu.VMEM((tm_eff, p), jnp.float32)],
        ),
        compiler_params=pltpu.CompilerParams(
            dimension_semantics=("parallel", "arbitrary"),
            vmem_limit_bytes=vmem_limit,
        ),
        cost_estimate=pl.CostEstimate(
            flops=flops, transcendentals=0, bytes_accessed=bytes_accessed),
    )(x, w_fused, b_fused)

    return scores, deltas


def init_params(key, input_size, num_classes, cls_agnostic_bbox_reg, box_dim=4):
    """Deterministic parameter init mirroring the module's __init__ (f32)."""
    if not isinstance(input_size, int):
        d = 1
        for s in input_size:
            d *= int(s)
        input_size = d
    num_bbox_reg_classes = 1 if cls_agnostic_bbox_reg else num_classes
    k_cls, k_bbox = jax.random.split(key)
    w_cls = 0.01 * jax.random.normal(
        k_cls, (num_classes + 1, input_size), dtype=jnp.float32)
    b_cls = jnp.zeros((num_classes + 1,), dtype=jnp.float32)
    w_bbox = 0.001 * jax.random.normal(
        k_bbox, (num_bbox_reg_classes * box_dim, input_size), dtype=jnp.float32)
    b_bbox = jnp.zeros((num_bbox_reg_classes * box_dim,), dtype=jnp.float32)
    return w_cls, b_cls, w_bbox, b_bbox


if __name__ == "__main__":
    # Small, module-consistent shapes:
    #   8 proposals, pooled feature (C=4, H=16, W=16) -> D = 1024
    #   num_classes = 8, box_dim = 4, class-specific bbox regression.
    key = jax.random.PRNGKey(0)
    k_x, k_p = jax.random.split(key)

    num_classes = 8
    box_dim = 4
    cls_agnostic = False
    x = jax.random.normal(k_x, (8, 4, 16, 16), dtype=jnp.float32)   # NCHW

    w_cls, b_cls, w_bbox, b_bbox = init_params(
        k_p, (4, 16, 16), num_classes, cls_agnostic, box_dim)

    # Fused / padded parameters are built once (init time), not per call.
    w_fused, b_fused, k_out, b_out = prepare_fused_params(
        w_cls, b_cls, w_bbox, b_bbox, compute_dtype=jnp.bfloat16)

    # Path 1: resident fused weight (single D slab).
    scores, deltas = fast_rcnn_output_layers(
        x, w_fused, b_fused, num_cls_out=k_out, num_box_out=b_out)
    # Path 2: streamed weight via the D-reduction grid axis (dk=256 -> 4 steps),
    # the code path used for very large D.
    scores2, deltas2 = fast_rcnn_output_layers(
        x, w_fused, b_fused, num_cls_out=k_out, num_box_out=b_out, dk=256)
    jax.block_until_ready((scores, deltas, scores2, deltas2))

    # References (same semantics as the PyTorch module).
    hp = jax.lax.Precision.HIGHEST
    xf = x.reshape(x.shape[0], -1)
    ref_scores = jnp.dot(xf, w_cls.T, precision=hp) + b_cls
    ref_deltas = jnp.dot(xf, w_bbox.T, precision=hp) + b_bbox

    # bf16-rounded reference (matches the kernel's compute dtype exactly).
    xbf = xf.astype(jnp.bfloat16).astype(jnp.float32)
    wcbf = w_cls.astype(jnp.bfloat16).astype(jnp.float32)
    wbbf = w_bbox.astype(jnp.bfloat16).astype(jnp.float32)
    ref_scores_bf = jnp.dot(xbf, wcbf.T, precision=hp) + b_cls
    ref_deltas_bf = jnp.dot(xbf, wbbf.T, precision=hp) + b_bbox

    assert scores.shape == (8, num_classes + 1)
    assert deltas.shape == (8, num_classes * box_dim)
    for s, d_ in ((scores, deltas), (scores2, deltas2)):
        # Tight check vs. bf16-matched reference.
        assert jnp.allclose(s, ref_scores_bf, atol=2e-3, rtol=2e-3)
        assert jnp.allclose(d_, ref_deltas_bf, atol=2e-3, rtol=2e-3)
        # Loose check vs. the full-precision module semantics.
        assert jnp.allclose(s, ref_scores, atol=5e-2, rtol=5e-2)
        assert jnp.allclose(d_, ref_deltas, atol=5e-2, rtol=5e-2)

    print("KERNEL_OK")
</pallas_src>

<mosaic_0001>
module attributes {stable_mosaic.version = 11 : i64} {
  func.func @_fused_heads_kernel(%arg0: i32, %arg1: i32, %arg2: memref<8x1024xf32, #tpu.memory_space<vmem>>, %arg3: memref<1024x256xbf16, #tpu.memory_space<vmem>>, %arg4: memref<1x256xf32, #tpu.memory_space<vmem>>, %arg5: memref<8x9xf32, #tpu.memory_space<vmem>>, %arg6: memref<8x32xf32, #tpu.memory_space<vmem>>, %arg7: memref<8x256xf32, #tpu.memory_space<vmem>>) attributes {dimension_semantics = [#tpu.dimension_semantics<parallel>, #tpu.dimension_semantics<arbitrary>], iteration_bounds = array<i64: 1, 1>, scalar_prefetch = 0 : i64, scratch_operands = 1 : i64, tpu.core_type = #tpu.core_type<tc>, window_params = [{transform_indices = @transform_0, window_bounds = array<i64: 8, 1024>}, {transform_indices = @transform_1, window_bounds = array<i64: 1024, 256>}, {pipeline_mode = #tpu.pipeline_mode<synchronous>, transform_indices = @transform_2, window_bounds = array<i64: 1, 256>}, {transform_indices = @transform_3, window_bounds = array<i64: 8, 9>}, {transform_indices = @transform_4, window_bounds = array<i64: 8, 32>}]} {
    %c0_i32 = arith.constant 0 : i32
    %0 = arith.cmpi eq, %arg1, %c0_i32 : i32
    %1 = arith.extui %0 : i1 to i32
    %c0_i32_0 = arith.constant 0 : i32
    %2 = arith.cmpi ne, %1, %c0_i32_0 : i32
    scf.if %2 {
      %cst_10 = arith.constant 0.000000e+00 : f32
      %13 = vector.broadcast %cst_10 : f32 to vector<8x256xf32>
      %c0_11 = arith.constant 0 : index
      %c0_12 = arith.constant 0 : index
      %14 = vector.load %arg7[%c0_11, %c0_12] : memref<8x256xf32, #tpu.memory_space<vmem>>, vector<8x256xf32>
      tpu.vector_store %arg7[%c0_11, %c0_12], %13 {strides = array<i32>} : memref<8x256xf32, #tpu.memory_space<vmem>>, vector<8x256xf32>,
    } else {
    }
    %c0 = arith.constant 0 : index
    %c0_1 = arith.constant 0 : index
    %3 = vector.load %arg7[%c0, %c0_1] : memref<8x256xf32, #tpu.memory_space<vmem>>, vector<8x256xf32>
    %c0_2 = arith.constant 0 : index
    %c0_3 = arith.constant 0 : index
    %4 = vector.load %arg2[%c0_2, %c0_3] : memref<8x1024xf32, #tpu.memory_space<vmem>>, vector<8x1024xf32>
    %5 = arith.truncf %4 : vector<8x1024xf32> to vector<8x1024xbf16>
    %c0_4 = arith.constant 0 : index
    %c0_5 = arith.constant 0 : index
    %6 = vector.load %arg3[%c0_4, %c0_5] : memref<1024x256xbf16, #tpu.memory_space<vmem>>, vector<1024x256xbf16>
    %cst = arith.constant dense<0.000000e+00> : vector<8x256xf32>
    %7 = tpu.matmul %5, %6, %cst {dimension_numbers = #tpu.dot_dimension_numbers<[1], [0], [0], [1], [0, 0, 1, 1], [], []>} : vector<8x1024xbf16>, vector<1024x256xbf16>, vector<8x256xf32> -> vector<8x256xf32>
    %8 = arith.addf %3, %7 : vector<8x256xf32>
    %c0_6 = arith.constant 0 : index
    %c0_7 = arith.constant 0 : index
    %9 = vector.load %arg7[%c0_6, %c0_7] : memref<8x256xf32, #tpu.memory_space<vmem>>, vector<8x256xf32>
    tpu.vector_store %arg7[%c0_6, %c0_7], %8 {strides = array<i32>} : memref<8x256xf32, #tpu.memory_space<vmem>>, vector<8x256xf32>,
    %c0_i32_8 = arith.constant 0 : i32
    %10 = arith.cmpi eq, %arg1, %c0_i32_8 : i32
    %11 = arith.extui %10 : i1 to i32
    %c0_i32_9 = arith.constant 0 : i32
    %12 = arith.cmpi ne, %11, %c0_i32_9 : i32
    scf.if %12 {
      %c0_10 = arith.constant 0 : index
      %c0_11 = arith.constant 0 : index
      %13 = vector.load %arg7[%c0_10, %c0_11] : memref<8x256xf32, #tpu.memory_space<vmem>>, vector<8x256xf32>
      %c0_12 = arith.constant 0 : index
      %c0_13 = arith.constant 0 : index
      %14 = vector.load %arg4[%c0_12, %c0_13] : memref<1x256xf32, #tpu.memory_space<vmem>>, vector<1x256xf32>
      %15 = vector.broadcast %14 : vector<1x256xf32> to vector<8x256xf32>
      %16 = arith.addf %13, %15 : vector<8x256xf32>
      %17 = vector.extract_strided_slice %16 {offsets = [0, 0], sizes = [8, 9], strides = [1, 1]} : vector<8x256xf32> to vector<8x9xf32>
      %c0_14 = arith.constant 0 : index
      %c0_15 = arith.constant 0 : index
      %18 = vector.load %arg5[%c0_14, %c0_15] : memref<8x9xf32, #tpu.memory_space<vmem>>, vector<8x9xf32>
      tpu.vector_store %arg5[%c0_14, %c0_15], %17 {strides = array<i32>} : memref<8x9xf32, #tpu.memory_space<vmem>>, vector<8x9xf32>,
      %19 = vector.extract_strided_slice %16 {offsets = [0, 128], sizes = [8, 32], strides = [1, 1]} : vector<8x256xf32> to vector<8x32xf32>
      %c0_16 = arith.constant 0 : index
      %c0_17 = arith.constant 0 : index
      %20 = vector.load %arg6[%c0_16, %c0_17] : memref<8x32xf32, #tpu.memory_space<vmem>>, vector<8x32xf32>
      tpu.vector_store %arg6[%c0_16, %c0_17], %19 {strides = array<i32>} : memref<8x32xf32, #tpu.memory_space<vmem>>, vector<8x32xf32>,
    } else {
    }
    return
  }
  func.func @transform_0(%arg0: i32, %arg1: i32) -> (i32, i32) {
    %c0_i32 = arith.constant 0 : i32
    return %arg0, %arg1 : i32, i32
  }
  func.func @transform_1(%arg0: i32, %arg1: i32) -> (i32, i32) {
    %c0_i32 = arith.constant 0 : i32
    %c0_i32_0 = arith.constant 0 : i32
    return %arg1, %c0_i32 : i32, i32
  }
  func.func @transform_2(%arg0: i32, %arg1: i32) -> (i32, i32) {
    %c0_i32 = arith.constant 0 : i32
    %c0_i32_0 = arith.constant 0 : i32
    %c0_i32_1 = arith.constant 0 : i32
    return %c0_i32, %c0_i32_0 : i32, i32
  }
  func.func @transform_3(%arg0: i32, %arg1: i32) -> (i32, i32) {
    %c0_i32 = arith.constant 0 : i32
    %c0_i32_0 = arith.constant 0 : i32
    return %arg0, %c0_i32 : i32, i32
  }
  func.func @transform_4(%arg0: i32, %arg1: i32) -> (i32, i32) {
    %c0_i32 = arith.constant 0 : i32
    %c0_i32_0 = arith.constant 0 : i32
    return %arg0, %c0_i32 : i32, i32
  }
}

</mosaic_0001>

<llo_original>
// kernel: fast_rcnn_output_layers.1
$region0: #{fast_rcnn_output_layers.1}
  #allocation0 [shape = 'u32[]', space=smem, size = 0x4, offset = 0x4, fixed_abs, tag = 'smem constant byte address 0x4 - core index']
  #allocation1 [shape = 'u32[144,128]{1,0:T(1,128)}', space=vmem, size = 0x12000, scoped, tag = 'internal scratch']
  #allocation2 [shape = 'f32[8,256]{1,0:T(8,128)}', space=vmem, size = 0x2000, scoped, tag = 'scratch operand']
  %s0 = inlined_call_operand.vmem [shape: f32[8,1024], index: 0, kind: input, shape index: {}]
  %s1 = inlined_call_operand.hbm [shape: bf16[1024,256], index: 1, kind: input, shape index: {}]
  %s2 = inlined_call_operand.vmem [shape: f32[1,256], index: 2, kind: input, shape index: {}]
  %s3 = inlined_call_operand.hbm [shape: f32[8,9], index: 3, kind: output, shape index: {0}]
  %s4 = inlined_call_operand.hbm [shape: f32[8,32], index: 4, kind: output, shape index: {1}]
  %5 = xla_tuple %s3, %s4
  %s6 = sld [smem:[#allocation0]]
  $region42: #{fast_rcnn_output_layers.1} parent=0
    _
  %s8 = ssub.s32 1, %s6
  %s9 = scalar_select 0, %s8, %s6
  $region1: #{fast_rcnn_output_layers.1} parent=0
    #allocation3 [shape = 'u8[524288]{0}', space=vmem, size = 0x80000, scoped, tag = 'input window, operand 1, single buffered']
    #allocation4 [shape = 's32[1]{0}', space=sflag, size = 0x4, scoped, tag = 'scoped memory for fast_rcnn_output_layers.1']
    #allocation5 [shape = 's32[1]{0}', space=sflag, size = 0x4, scoped, tag = 'scoped memory for fast_rcnn_output_layers.1']
    #allocation6 [shape = 'u8[4096]{0}', space=vmem, size = 0x1000, scoped, tag = 'output window, operand 0, single buffered']
    #allocation7 [shape = 'u8[4096]{0}', space=vmem, size = 0x1000, scoped, tag = 'output window, operand 1, single buffered']
    #allocation8 [shape = 's32[1]{0}', space=sflag, size = 0x4, scoped, tag = 'scoped memory for fast_rcnn_output_layers.1']
    %10 = vsyncpa [#allocation4], 0
    %11 = vsyncpa [#allocation5], 0
    %12 = vsyncpa [#allocation8], 0
    // Predicated region
    $region2: #{fast_rcnn_output_layers.1} parent=1 // pred_check
      _
    $region3: #{fast_rcnn_output_layers.1} parent=1 // pred_check_branch
      %14 = sbr.rel (0) target = $region5
    $region4: #{fast_rcnn_output_layers.1} parent=1 // pred_region
      _
    $region5: #{fast_rcnn_output_layers.1} parent=1 // pred_fallthru
      _
    // Predicated region
    $region6: #{fast_rcnn_output_layers.1} parent=1 // pred_check
      _
    $region7: #{fast_rcnn_output_layers.1} parent=1 // pred_check_branch
      %16 = sbr.rel (0) target = $region9
    $region8: #{fast_rcnn_output_layers.1} parent=1 // pred_region
      %s18 = ssub.s32 16384, 16384
      %19 = vsyncadd [#allocation4], %s18
      %s20 = sshll.u32 [#allocation3], 4
      %s21 = int_to_ptr.vmem [resolvable:$true] %s20
      %26 = dma.hbm_to_vmem [thread:$0]  %s1, 16384, %s21, [#allocation4], 128, 128, 8
    $region9: #{fast_rcnn_output_layers.1} parent=1 // pred_fallthru
      _
    // Predicated region
    $region10: #{fast_rcnn_output_layers.1} parent=1 // pred_check
      _
    $region11: #{fast_rcnn_output_layers.1} parent=1 // pred_check_branch
      %28 = sbr.rel (0) target = $region13
    $region12: #{fast_rcnn_output_layers.1} parent=1 // pred_region
      _
    $region13: #{fast_rcnn_output_layers.1} parent=1 // pred_fallthru
      _
    // Predicated region
    $region14: #{fast_rcnn_output_layers.1} parent=1 // pred_check
      _
    $region15: #{fast_rcnn_output_layers.1} parent=1 // pred_check_branch
      %30 = sbr.rel (0) target = $region17
    $region16: #{fast_rcnn_output_layers.1} parent=1 // pred_region
      %31 = dma.done [#allocation4], 16384
    $region17: #{fast_rcnn_output_layers.1} parent=1 // pred_fallthru
      _
    %p32 = scmp.eq.s32.totalorder 0, 0
    // Predicated region
    $region18: #{fast_rcnn_output_layers.1} parent=1 // pred_check
      %p33 = pneg %p32
    $region19: #{fast_rcnn_output_layers.1} parent=1 // pred_check_branch
      %35 = sbr.rel (%p33) target = $region21
    $region20: #{fast_rcnn_output_layers.1} parent=1 // pred_region
      %36 = vst [vmem:[#allocation2] sm:$0xff] 0.0
      %37 = vst [vmem:[#allocation2 + $0x8] sm:$0xff] 0.0
    $region21: #{fast_rcnn_output_layers.1} parent=1 // pred_fallthru
      _
    %v38 = vld [vmem:[#allocation2] sm:$0xff]
    %v39 = vld [vmem:[#allocation2 + $0x8] sm:$0xff]
    %v40 = vld [vmem:[%s0] sm:$0xff]
    %v41 = vld [vmem:[%s0 + $0x8] sm:$0xff]
    %v42 = vld [vmem:[%s0 + $0x10] sm:$0xff]
    %v43 = vld [vmem:[%s0 + $0x18] sm:$0xff]
    %v44 = vld [vmem:[%s0 + $0x20] sm:$0xff]
    %v45 = vld [vmem:[%s0 + $0x28] sm:$0xff]
    %v46 = vld [vmem:[%s0 + $0x30] sm:$0xff]
    %v47 = vld [vmem:[%s0 + $0x38] sm:$0xff]
    %v48 = vpack.c.bf16 %v40, %v40
    %v49 = vpack.c.bf16 %v41, %v41
    %v50 = vpack.c.bf16 %v42, %v42
    %v51 = vpack.c.bf16 %v43, %v43
    %v52 = vpack.c.bf16 %v44, %v44
    %v53 = vpack.c.bf16 %v45, %v45
    %v54 = vpack.c.bf16 %v46, %v46
    %v55 = vpack.c.bf16 %v47, %v47
    %v56 = vld [vmem:[#allocation3] sm:$0xff]
    %v57 = vld [vmem:[#allocation3 + $0x8] sm:$0xff]
    %v58 = vld [vmem:[#allocation3 + $0x10] sm:$0xff]
    %v59 = vld [vmem:[#allocation3 + $0x18] sm:$0xff]
    %v60 = vld [vmem:[#allocation3 + $0x20] sm:$0xff]
    %v61 = vld [vmem:[#allocation3 + $0x28] sm:$0xff]
    %v62 = vld [vmem:[#allocation3 + $0x30] sm:$0xff]
    %v63 = vld [vmem:[#allocation3 + $0x38] sm:$0xff]
    %v64 = vld [vmem:[#allocation3 + $0x40] sm:$0xff]
    %v65 = vld [vmem:[#allocation3 + $0x48] sm:$0xff]
    %v66 = vld [vmem:[#allocation3 + $0x50] sm:$0xff]
    %v67 = vld [vmem:[#allocation3 + $0x58] sm:$0xff]
    %v68 = vld [vmem:[#allocation3 + $0x60] sm:$0xff]
    %v69 = vld [vmem:[#allocation3 + $0x68] sm:$0xff]
    %v70 = vld [vmem:[#allocation3 + $0x70] sm:$0xff]
    %v71 = vld [vmem:[#allocation3 + $0x78] sm:$0xff]
    %v72 = vld [vmem:[#allocation3 + $0x80] sm:$0xff]
    %v73 = vld [vmem:[#allocation3 + $0x88] sm:$0xff]
    %v74 = vld [vmem:[#allocation3 + $0x90] sm:$0xff]
    %v75 = vld [vmem:[#allocation3 + $0x98] sm:$0xff]
    %v76 = vld [vmem:[#allocation3 + $0xa0] sm:$0xff]
    %v77 = vld [vmem:[#allocation3 + $0xa8] sm:$0xff]
    %v78 = vld [vmem:[#allocation3 + $0xb0] sm:$0xff]
    %v79 = vld [vmem:[#allocation3 + $0xb8] sm:$0xff]
    %v80 = vld [vmem:[#allocation3 + $0xc0] sm:$0xff]
    %v81 = vld [vmem:[#allocation3 + $0xc8] sm:$0xff]
    %v82 = vld [vmem:[#allocation3 + $0xd0] sm:$0xff]
    %v83 = vld [vmem:[#allocation3 + $0xd8] sm:$0xff]
    %v84 = vld [vmem:[#allocation3 + $0xe0] sm:$0xff]
    %v85 = vld [vmem:[#allocation3 + $0xe8] sm:$0xff]
    %v86 = vld [vmem:[#allocation3 + $0xf0] sm:$0xff]
    %v87 = vld [vmem:[#allocation3 + $0xf8] sm:$0xff]
    %v88 = vld [vmem:[#allocation3 + $0x100] sm:$0xff]
    %v89 = vld [vmem:[#allocation3 + $0x108] sm:$0xff]
    %v90 = vld [vmem:[#allocation3 + $0x110] sm:$0xff]
    %v91 = vld [vmem:[#allocation3 + $0x118] sm:$0xff]
    %v92 = vld [vmem:[#allocation3 + $0x120] sm:$0xff]
    %v93 = vld [vmem:[#allocation3 + $0x128] sm:$0xff]
    %v94 = vld [vmem:[#allocation3 + $0x130] sm:$0xff]
    %v95 = vld [vmem:[#allocation3 + $0x138] sm:$0xff]
    %v96 = vld [vmem:[#allocation3 + $0x140] sm:$0xff]
    %v97 = vld [vmem:[#allocation3 + $0x148] sm:$0xff]
    %v98 = vld [vmem:[#allocation3 + $0x150] sm:$0xff]
    %v99 = vld [vmem:[#allocation3 + $0x158] sm:$0xff]
    %v100 = vld [vmem:[#allocation3 + $0x160] sm:$0xff]
    %v101 = vld [vmem:[#allocation3 + $0x168] sm:$0xff]
    %v102 = vld [vmem:[#allocation3 + $0x170] sm:$0xff]
    %v103 = vld [vmem:[#allocation3 + $0x178] sm:$0xff]
    %v104 = vld [vmem:[#allocation3 + $0x180] sm:$0xff]
    %v105 = vld [vmem:[#allocation3 + $0x188] sm:$0xff]
    %v106 = vld [vmem:[#allocation3 + $0x190] sm:$0xff]
    %v107 = vld [vmem:[#allocation3 + $0x198] sm:$0xff]
    %v108 = vld [vmem:[#allocation3 + $0x1a0] sm:$0xff]
    %v109 = vld [vmem:[#allocation3 + $0x1a8] sm:$0xff]
    %v110 = vld [vmem:[#allocation3 + $0x1b0] sm:$0xff]
    %v111 = vld [vmem:[#allocation3 + $0x1b8] sm:$0xff]
    %v112 = vld [vmem:[#allocation3 + $0x1c0] sm:$0xff]
    %v113 = vld [vmem:[#allocation3 + $0x1c8] sm:$0xff]
    %v114 = vld [vmem:[#allocation3 + $0x1d0] sm:$0xff]
    %v115 = vld [vmem:[#allocation3 + $0x1d8] sm:$0xff]
    %v116 = vld [vmem:[#allocation3 + $0x1e0] sm:$0xff]
    %v117 = vld [vmem:[#allocation3 + $0x1e8] sm:$0xff]
    %v118 = vld [vmem:[#allocation3 + $0x1f0] sm:$0xff]
    %v119 = vld [vmem:[#allocation3 + $0x1f8] sm:$0xff]
    %v120 = vld [vmem:[#allocation3 + $0x200] sm:$0xff]
    %v121 = vld [vmem:[#allocation3 + $0x208] sm:$0xff]
    %v122 = vld [vmem:[#allocation3 + $0x210] sm:$0xff]
    %v123 = vld [vmem:[#allocation3 + $0x218] sm:$0xff]
    %v124 = vld [vmem:[#allocation3 + $0x220] sm:$0xff]
    %v125 = vld [vmem:[#allocation3 + $0x228] sm:$0xff]
    %v126 = vld [vmem:[#allocation3 + $0x230] sm:$0xff]
    %v127 = vld [vmem:[#allocation3 + $0x238] sm:$0xff]
    %v128 = vld [vmem:[#allocation3 + $0x240] sm:$0xff]
    %v129 = vld [vmem:[#allocation3 + $0x248] sm:$0xff]
    %v130 = vld [vmem:[#allocation3 + $0x250] sm:$0xff]
    %v131 = vld [vmem:[#allocation3 + $0x258] sm:$0xff]
    %v132 = vld [vmem:[#allocation3 + $0x260] sm:$0xff]
    %v133 = vld [vmem:[#allocation3 + $0x268] sm:$0xff]
    %v134 = vld [vmem:[#allocation3 + $0x270] sm:$0xff]
    %v135 = vld [vmem:[#allocation3 + $0x278] sm:$0xff]
    %v136 = vld [vmem:[#allocation3 + $0x280] sm:$0xff]
    %v137 = vld [vmem:[#allocation3 + $0x288] sm:$0xff]
    %v138 = vld [vmem:[#allocation3 + $0x290] sm:$0xff]
    %v139 = vld [vmem:[#allocation3 + $0x298] sm:$0xff]
    %v140 = vld [vmem:[#allocation3 + $0x2a0] sm:$0xff]
    %v141 = vld [vmem:[#allocation3 + $0x2a8] sm:$0xff]
    %v142 = vld [vmem:[#allocation3 + $0x2b0] sm:$0xff]
    %v143 = vld [vmem:[#allocation3 + $0x2b8] sm:$0xff]
    %v144 = vld [vmem:[#allocation3 + $0x2c0] sm:$0xff]
    %v145 = vld [vmem:[#allocation3 + $0x2c8] sm:$0xff]
    %v146 = vld [vmem:[#allocation3 + $0x2d0] sm:$0xff]
    %v147 = vld [vmem:[#allocation3 + $0x2d8] sm:$0xff]
    %v148 = vld [vmem:[#allocation3 + $0x2e0] sm:$0xff]
    %v149 = vld [vmem:[#allocation3 + $0x2e8] sm:$0xff]
    %v150 = vld [vmem:[#allocation3 + $0x2f0] sm:$0xff]
    %v151 = vld [vmem:[#allocation3 + $0x2f8] sm:$0xff]
    %v152 = vld [vmem:[#allocation3 + $0x300] sm:$0xff]
    %v153 = vld [vmem:[#allocation3 + $0x308] sm:$0xff]
    %v154 = vld [vmem:[#allocation3 + $0x310] sm:$0xff]
    %v155 = vld [vmem:[#allocation3 + $0x318] sm:$0xff]
    %v156 = vld [vmem:[#allocation3 + $0x320] sm:$0xff]
    %v157 = vld [vmem:[#allocation3 + $0x328] sm:$0xff]
    %v158 = vld [vmem:[#allocation3 + $0x330] sm:$0xff]
    %v159 = vld [vmem:[#allocation3 + $0x338] sm:$0xff]
    %v160 = vld [vmem:[#allocation3 + $0x340] sm:$0xff]
    %v161 = vld [vmem:[#allocation3 + $0x348] sm:$0xff]
    %v162 = vld [vmem:[#allocation3 + $0x350] sm:$0xff]
    %v163 = vld [vmem:[#allocation3 + $0x358] sm:$0xff]
    %v164 = vld [vmem:[#allocation3 + $0x360] sm:$0xff]
    %v165 = vld [vmem:[#allocation3 + $0x368] sm:$0xff]
    %v166 = vld [vmem:[#allocation3 + $0x370] sm:$0xff]
    %v167 = vld [vmem:[#allocation3 + $0x378] sm:$0xff]
    %v168 = vld [vmem:[#allocation3 + $0x380] sm:$0xff]
    %v169 = vld [vmem:[#allocation3 + $0x388] sm:$0xff]
    %v170 = vld [vmem:[#allocation3 + $0x390] sm:$0xff]
    %v171 = vld [vmem:[#allocation3 + $0x398] sm:$0xff]
    %v172 = vld [vmem:[#allocation3 + $0x3a0] sm:$0xff]
    %v173 = vld [vmem:[#allocation3 + $0x3a8] sm:$0xff]
    %v174 = vld [vmem:[#allocation3 + $0x3b0] sm:$0xff]
    %v175 = vld [vmem:[#allocation3 + $0x3b8] sm:$0xff]
    %v176 = vld [vmem:[#allocation3 + $0x3c0] sm:$0xff]
    %v177 = vld [vmem:[#allocation3 + $0x3c8] sm:$0xff]
    %v178 = vld [vmem:[#allocation3 + $0x3d0] sm:$0xff]
    %v179 = vld [vmem:[#allocation3 + $0x3d8] sm:$0xff]
    %v180 = vld [vmem:[#allocation3 + $0x3e0] sm:$0xff]
    %v181 = vld [vmem:[#allocation3 + $0x3e8] sm:$0xff]
    %v182 = vld [vmem:[#allocation3 + $0x3f0] sm:$0xff]
    %v183 = vld [vmem:[#allocation3 + $0x3f8] sm:$0xff]
    %v312 = vunpack.c.l.b16 %v56
    %v313 = vunpack.c.h.b16 %v56
    %v314 = vunpack.c.l.b16 %v57
    %v315 = vunpack.c.h.b16 %v57
    %v316 = vunpack.c.l.b16 %v58
    %v317 = vunpack.c.h.b16 %v58
    %v318 = vunpack.c.l.b16 %v59
    %v319 = vunpack.c.h.b16 %v59
    %v320 = vunpack.c.l.b16 %v60
    %v321 = vunpack.c.h.b16 %v60
    %v322 = vunpack.c.l.b16 %v61
    %v323 = vunpack.c.h.b16 %v61
    %v324 = vunpack.c.l.b16 %v62
    %v325 = vunpack.c.h.b16 %v62
    %v326 = vunpack.c.l.b16 %v63
    %v327 = vunpack.c.h.b16 %v63
    %v328 = vunpack.c.l.b16 %v64
    %v329 = vunpack.c.h.b16 %v64
    %v330 = vunpack.c.l.b16 %v65
    %v331 = vunpack.c.h.b16 %v65
    %v332 = vunpack.c.l.b16 %v66
    %v333 = vunpack.c.h.b16 %v66
    %v334 = vunpack.c.l.b16 %v67
    %v335 = vunpack.c.h.b16 %v67
    %v336 = vunpack.c.l.b16 %v68
    %v337 = vunpack.c.h.b16 %v68
    %v338 = vunpack.c.l.b16 %v69
    %v339 = vunpack.c.h.b16 %v69
    %v340 = vunpack.c.l.b16 %v70
    %v341 = vunpack.c.h.b16 %v70
    %v342 = vunpack.c.l.b16 %v71
    %v343 = vunpack.c.h.b16 %v71
    %v344 = vunpack.c.l.b16 %v72
    %v345 = vunpack.c.h.b16 %v72
    %v346 = vunpack.c.l.b16 %v73
    %v347 = vunpack.c.h.b16 %v73
    %v348 = vunpack.c.l.b16 %v74
    %v349 = vunpack.c.h.b16 %v74
    %v350 = vunpack.c.l.b16 %v75
    %v351 = vunpack.c.h.b16 %v75
    %v352 = vunpack.c.l.b16 %v76
    %v353 = vunpack.c.h.b16 %v76
    %v354 = vunpack.c.l.b16 %v77
    %v355 = vunpack.c.h.b16 %v77
    %v356 = vunpack.c.l.b16 %v78
    %v357 = vunpack.c.h.b16 %v78
    %v358 = vunpack.c.l.b16 %v79
    %v359 = vunpack.c.h.b16 %v79
    %v360 = vunpack.c.l.b16 %v80
    %v361 = vunpack.c.h.b16 %v80
    %v362 = vunpack.c.l.b16 %v81
    %v363 = vunpack.c.h.b16 %v81
    %v364 = vunpack.c.l.b16 %v82
    %v365 = vunpack.c.h.b16 %v82
    %v366 = vunpack.c.l.b16 %v83
    %v367 = vunpack.c.h.b16 %v83
    %v368 = vunpack.c.l.b16 %v84
    %v369 = vunpack.c.h.b16 %v84
    %v370 = vunpack.c.l.b16 %v85
    %v371 = vunpack.c.h.b16 %v85
    %v372 = vunpack.c.l.b16 %v86
    %v373 = vunpack.c.h.b16 %v86
    %v374 = vunpack.c.l.b16 %v87
    %v375 = vunpack.c.h.b16 %v87
    %v376 = vunpack.c.l.b16 %v88
    %v377 = vunpack.c.h.b16 %v88
    %v378 = vunpack.c.l.b16 %v89
    %v379 = vunpack.c.h.b16 %v89
    %v380 = vunpack.c.l.b16 %v90
    %v381 = vunpack.c.h.b16 %v90
    %v382 = vunpack.c.l.b16 %v91
    %v383 = vunpack.c.h.b16 %v91
    %v384 = vunpack.c.l.b16 %v92
    %v385 = vunpack.c.h.b16 %v92
    %v386 = vunpack.c.l.b16 %v93
    %v387 = vunpack.c.h.b16 %v93
    %v388 = vunpack.c.l.b16 %v94
    %v389 = vunpack.c.h.b16 %v94
    %v390 = vunpack.c.l.b16 %v95
    %v391 = vunpack.c.h.b16 %v95
    %v392 = vunpack.c.l.b16 %v96
    %v393 = vunpack.c.h.b16 %v96
    %v394 = vunpack.c.l.b16 %v97
    %v395 = vunpack.c.h.b16 %v97
    %v396 = vunpack.c.l.b16 %v98
    %v397 = vunpack.c.h.b16 %v98
    %v398 = vunpack.c.l.b16 %v99
    %v399 = vunpack.c.h.b16 %v99
    %v400 = vunpack.c.l.b16 %v100
    %v401 = vunpack.c.h.b16 %v100
    %v402 = vunpack.c.l.b16 %v101
    %v403 = vunpack.c.h.b16 %v101
    %v404 = vunpack.c.l.b16 %v102
    %v405 = vunpack.c.h.b16 %v102
    %v406 = vunpack.c.l.b16 %v103
    %v407 = vunpack.c.h.b16 %v103
    %v408 = vunpack.c.l.b16 %v104
    %v409 = vunpack.c.h.b16 %v104
    %v410 = vunpack.c.l.b16 %v105
    %v411 = vunpack.c.h.b16 %v105
    %v412 = vunpack.c.l.b16 %v106
    %v413 = vunpack.c.h.b16 %v106
    %v414 = vunpack.c.l.b16 %v107
    %v415 = vunpack.c.h.b16 %v107
    %v416 = vunpack.c.l.b16 %v108
    %v417 = vunpack.c.h.b16 %v108
    %v418 = vunpack.c.l.b16 %v109
    %v419 = vunpack.c.h.b16 %v109
    %v420 = vunpack.c.l.b16 %v110
    %v421 = vunpack.c.h.b16 %v110
    %v422 = vunpack.c.l.b16 %v111
    %v423 = vunpack.c.h.b16 %v111
    %v424 = vunpack.c.l.b16 %v112
    %v425 = vunpack.c.h.b16 %v112
    %v426 = vunpack.c.l.b16 %v113
    %v427 = vunpack.c.h.b16 %v113
    %v428 = vunpack.c.l.b16 %v114
    %v429 = vunpack.c.h.b16 %v114
    %v430 = vunpack.c.l.b16 %v115
    %v431 = vunpack.c.h.b16 %v115
    %v432 = vunpack.c.l.b16 %v116
    %v433 = vunpack.c.h.b16 %v116
    %v434 = vunpack.c.l.b16 %v117
    %v435 = vunpack.c.h.b16 %v117
    %v436 = vunpack.c.l.b16 %v118
    %v437 = vunpack.c.h.b16 %v118
    %v438 = vunpack.c.l.b16 %v119
    %v439 = vunpack.c.h.b16 %v119
    %v440 = vunpack.c.l.b16 %v120
    %v441 = vunpack.c.h.b16 %v120
    %v442 = vunpack.c.l.b16 %v121
    %v443 = vunpack.c.h.b16 %v121
    %v444 = vunpack.c.l.b16 %v122
    %v445 = vunpack.c.h.b16 %v122
    %v446 = vunpack.c.l.b16 %v123
    %v447 = vunpack.c.h.b16 %v123
    %v448 = vunpack.c.l.b16 %v124
    %v449 = vunpack.c.h.b16 %v124
    %v450 = vunpack.c.l.b16 %v125
    %v451 = vunpack.c.h.b16 %v125
    %v452 = vunpack.c.l.b16 %v126
    %v453 = vunpack.c.h.b16 %v126
    %v454 = vunpack.c.l.b16 %v127
    %v455 = vunpack.c.h.b16 %v127
    %v456 = vunpack.c.l.b16 %v128
    %v457 = vunpack.c.h.b16 %v128
    %v458 = vunpack.c.l.b16 %v129
    %v459 = vunpack.c.h.b16 %v129
    %v460 = vunpack.c.l.b16 %v130
    %v461 = vunpack.c.h.b16 %v130
    %v462 = vunpack.c.l.b16 %v131
    %v463 = vunpack.c.h.b16 %v131
    %v464 = vunpack.c.l.b16 %v132
    %v465 = vunpack.c.h.b16 %v132
    %v466 = vunpack.c.l.b16 %v133
    %v467 = vunpack.c.h.b16 %v133
    %v468 = vunpack.c.l.b16 %v134
    %v469 = vunpack.c.h.b16 %v134
    %v470 = vunpack.c.l.b16 %v135
    %v471 = vunpack.c.h.b16 %v135
    %v472 = vunpack.c.l.b16 %v136
    %v473 = vunpack.c.h.b16 %v136
    %v474 = vunpack.c.l.b16 %v137
    %v475 = vunpack.c.h.b16 %v137
    %v476 = vunpack.c.l.b16 %v138
    %v477 = vunpack.c.h.b16 %v138
    %v478 = vunpack.c.l.b16 %v139
    %v479 = vunpack.c.h.b16 %v139
    %v480 = vunpack.c.l.b16 %v140
    %v481 = vunpack.c.h.b16 %v140
    %v482 = vunpack.c.l.b16 %v141
    %v483 = vunpack.c.h.b16 %v141
    %v484 = vunpack.c.l.b16 %v142
    %v485 = vunpack.c.h.b16 %v142
    %v486 = vunpack.c.l.b16 %v143
    %v487 = vunpack.c.h.b16 %v143
    %v488 = vunpack.c.l.b16 %v144
    %v489 = vunpack.c.h.b16 %v144
    %v490 = vunpack.c.l.b16 %v145
    %v491 = vunpack.c.h.b16 %v145
    %v492 = vunpack.c.l.b16 %v146
    %v493 = vunpack.c.h.b16 %v146
    %v494 = vunpack.c.l.b16 %v147
    %v495 = vunpack.c.h.b16 %v147
    %v496 = vunpack.c.l.b16 %v148
    %v497 = vunpack.c.h.b16 %v148
    %v498 = vunpack.c.l.b16 %v149
    %v499 = vunpack.c.h.b16 %v149
    %v500 = vunpack.c.l.b16 %v150
    %v501 = vunpack.c.h.b16 %v150
    %v502 = vunpack.c.l.b16 %v151
    %v503 = vunpack.c.h.b16 %v151
    %v504 = vunpack.c.l.b16 %v152
    %v505 = vunpack.c.h.b16 %v152
    %v506 = vunpack.c.l.b16 %v153
    %v507 = vunpack.c.h.b16 %v153
    %v508 = vunpack.c.l.b16 %v154
    %v509 = vunpack.c.h.b16 %v154
    %v510 = vunpack.c.l.b16 %v155
    %v511 = vunpack.c.h.b16 %v155
    %v512 = vunpack.c.l.b16 %v156
    %v513 = vunpack.c.h.b16 %v156
    %v514 = vunpack.c.l.b16 %v157
    %v515 = vunpack.c.h.b16 %v157
    %v516 = vunpack.c.l.b16 %v158
    %v517 = vunpack.c.h.b16 %v158
    %v518 = vunpack.c.l.b16 %v159
    %v519 = vunpack.c.h.b16 %v159
    %v520 = vunpack.c.l.b16 %v160
    %v521 = vunpack.c.h.b16 %v160
    %v522 = vunpack.c.l.b16 %v161
    %v523 = vunpack.c.h.b16 %v161
    %v524 = vunpack.c.l.b16 %v162
    %v525 = vunpack.c.h.b16 %v162
    %v526 = vunpack.c.l.b16 %v163
    %v527 = vunpack.c.h.b16 %v163
    %v528 = vunpack.c.l.b16 %v164
    %v529 = vunpack.c.h.b16 %v164
    %v530 = vunpack.c.l.b16 %v165
    %v531 = vunpack.c.h.b16 %v165
    %v532 = vunpack.c.l.b16 %v166
    %v533 = vunpack.c.h.b16 %v166
    %v534 = vunpack.c.l.b16 %v167
    %v535 = vunpack.c.h.b16 %v167
    %v536 = vunpack.c.l.b16 %v168
    %v537 = vunpack.c.h.b16 %v168
    %v538 = vunpack.c.l.b16 %v169
    %v539 = vunpack.c.h.b16 %v169
    %v540 = vunpack.c.l.b16 %v170
    %v541 = vunpack.c.h.b16 %v170
    %v542 = vunpack.c.l.b16 %v171
    %v543 = vunpack.c.h.b16 %v171
    %v544 = vunpack.c.l.b16 %v172
    %v545 = vunpack.c.h.b16 %v172
    %v546 = vunpack.c.l.b16 %v173
    %v547 = vunpack.c.h.b16 %v173
    %v548 = vunpack.c.l.b16 %v174
    %v549 = vunpack.c.h.b16 %v174
    %v550 = vunpack.c.l.b16 %v175
    %v551 = vunpack.c.h.b16 %v175
    %v552 = vunpack.c.l.b16 %v176
    %v553 = vunpack.c.h.b16 %v176
    %v554 = vunpack.c.l.b16 %v177
    %v555 = vunpack.c.h.b16 %v177
    %v556 = vunpack.c.l.b16 %v178
    %v557 = vunpack.c.h.b16 %v178
    %v558 = vunpack.c.l.b16 %v179
    %v559 = vunpack.c.h.b16 %v179
    %v560 = vunpack.c.l.b16 %v180
    %v561 = vunpack.c.h.b16 %v180
    %v562 = vunpack.c.l.b16 %v181
    %v563 = vunpack.c.h.b16 %v181
    %v564 = vunpack.c.l.b16 %v182
    %v565 = vunpack.c.h.b16 %v182
    %v566 = vunpack.c.l.b16 %v183
    %v567 = vunpack.c.h.b16 %v183
    %v568 = vpack.c.b16 %v314, %v312
    %v569 = vpack.c.b16 %v315, %v313
    %v570 = vpack.c.b16 %v318, %v316
    %v571 = vpack.c.b16 %v319, %v317
    %v572 = vpack.c.b16 %v322, %v320
    %v573 = vpack.c.b16 %v323, %v321
    %v574 = vpack.c.b16 %v326, %v324
    %v575 = vpack.c.b16 %v327, %v325
    %v576 = vpack.c.b16 %v330, %v328
    %v577 = vpack.c.b16 %v331, %v329
    %v578 = vpack.c.b16 %v334, %v332
    %v579 = vpack.c.b16 %v335, %v333
    %v580 = vpack.c.b16 %v338, %v336
    %v581 = vpack.c.b16 %v339, %v337
    %v582 = vpack.c.b16 %v342, %v340
    %v583 = vpack.c.b16 %v343, %v341
    %v584 = vpack.c.b16 %v346, %v344
    %v585 = vpack.c.b16 %v347, %v345
    %v586 = vpack.c.b16 %v350, %v348
    %v587 = vpack.c.b16 %v351, %v349
    %v588 = vpack.c.b16 %v354, %v352
    %v589 = vpack.c.b16 %v355, %v353
    %v590 = vpack.c.b16 %v358, %v356
    %v591 = vpack.c.b16 %v359, %v357
    %v592 = vpack.c.b16 %v362, %v360
    %v593 = vpack.c.b16 %v363, %v361
    %v594 = vpack.c.b16 %v366, %v364
    %v595 = vpack.c.b16 %v367, %v365
    %v596 = vpack.c.b16 %v370, %v368
    %v597 = vpack.c.b16 %v371, %v369
    %v598 = vpack.c.b16 %v374, %v372
    %v599 = vpack.c.b16 %v375, %v373
    %v600 = vpack.c.b16 %v378, %v376
    %v601 = vpack.c.b16 %v379, %v377
    %v602 = vpack.c.b16 %v382, %v380
    %v603 = vpack.c.b16 %v383, %v381
    %v604 = vpack.c.b16 %v386, %v384
    %v605 = vpack.c.b16 %v387, %v385
    %v606 = vpack.c.b16 %v390, %v388
    %v607 = vpack.c.b16 %v391, %v389
    %v608 = vpack.c.b16 %v394, %v392
    %v609 = vpack.c.b16 %v395, %v393
    %v610 = vpack.c.b16 %v398, %v396
    %v611 = vpack.c.b16 %v399, %v397
    %v612 = vpack.c.b16 %v402, %v400
    %v613 = vpack.c.b16 %v403, %v401
    %v614 = vpack.c.b16 %v406, %v404
    %v615 = vpack.c.b16 %v407, %v405
    %v616 = vpack.c.b16 %v410, %v408
    %v617 = vpack.c.b16 %v411, %v409
    %v618 = vpack.c.b16 %v414, %v412
    %v619 = vpack.c.b16 %v415, %v413
    %v620 = vpack.c.b16 %v418, %v416
    %v621 = vpack.c.b16 %v419, %v417
    %v622 = vpack.c.b16 %v422, %v420
    %v623 = vpack.c.b16 %v423, %v421
    %v624 = vpack.c.b16 %v426, %v424
    %v625 = vpack.c.b16 %v427, %v425
    %v626 = vpack.c.b16 %v430, %v428
    %v627 = vpack.c.b16 %v431, %v429
    %v628 = vpack.c.b16 %v434, %v432
    %v629 = vpack.c.b16 %v435, %v433
    %v630 = vpack.c.b16 %v438, %v436
    %v631 = vpack.c.b16 %v439, %v437
    %v632 = vpack.c.b16 %v442, %v440
    %v633 = vpack.c.b16 %v443, %v441
    %v634 = vpack.c.b16 %v446, %v444
    %v635 = vpack.c.b16 %v447, %v445
    %v636 = vpack.c.b16 %v450, %v448
    %v637 = vpack.c.b16 %v451, %v449
    %v638 = vpack.c.b16 %v454, %v452
    %v639 = vpack.c.b16 %v455, %v453
    %v640 = vpack.c.b16 %v458, %v456
    %v641 = vpack.c.b16 %v459, %v457
    %v642 = vpack.c.b16 %v462, %v460
    %v643 = vpack.c.b16 %v463, %v461
    %v644 = vpack.c.b16 %v466, %v464
    %v645 = vpack.c.b16 %v467, %v465
    %v646 = vpack.c.b16 %v470, %v468
    %v647 = vpack.c.b16 %v471, %v469
    %v648 = vpack.c.b16 %v474, %v472
    %v649 = vpack.c.b16 %v475, %v473
    %v650 = vpack.c.b16 %v478, %v476
    %v651 = vpack.c.b16 %v479, %v477
    %v652 = vpack.c.b16 %v482, %v480
    %v653 = vpack.c.b16 %v483, %v481
    %v654 = vpack.c.b16 %v486, %v484
    %v655 = vpack.c.b16 %v487, %v485
    %v656 = vpack.c.b16 %v490, %v488
    %v657 = vpack.c.b16 %v491, %v489
    %v658 = vpack.c.b16 %v494, %v492
    %v659 = vpack.c.b16 %v495, %v493
    %v660 = vpack.c.b16 %v498, %v496
    %v661 = vpack.c.b16 %v499, %v497
    %v662 = vpack.c.b16 %v502, %v500
    %v663 = vpack.c.b16 %v503, %v501
    %v664 = vpack.c.b16 %v506, %v504
    %v665 = vpack.c.b16 %v507, %v505
    %v666 = vpack.c.b16 %v510, %v508
    %v667 = vpack.c.b16 %v511, %v509
    %v668 = vpack.c.b16 %v514, %v512
    %v669 = vpack.c.b16 %v515, %v513
    %v670 = vpack.c.b16 %v518, %v516
    %v671 = vpack.c.b16 %v519, %v517
    %v672 = vpack.c.b16 %v522, %v520
    %v673 = vpack.c.b16 %v523, %v521
    %v674 = vpack.c.b16 %v526, %v524
    %v675 = vpack.c.b16 %v527, %v525
    %v676 = vpack.c.b16 %v530, %v528
    %v677 = vpack.c.b16 %v531, %v529
    %v678 = vpack.c.b16 %v534, %v532
    %v679 = vpack.c.b16 %v535, %v533
    %v680 = vpack.c.b16 %v538, %v536
    %v681 = vpack.c.b16 %v539, %v537
    %v682 = vpack.c.b16 %v542, %v540
    %v683 = vpack.c.b16 %v543, %v541
    %v684 = vpack.c.b16 %v546, %v544
    %v685 = vpack.c.b16 %v547, %v545
    %v686 = vpack.c.b16 %v550, %v548
    %v687 = vpack.c.b16 %v551, %v549
    %v688 = vpack.c.b16 %v554, %v552
    %v689 = vpack.c.b16 %v555, %v553
    %v690 = vpack.c.b16 %v558, %v556
    %v691 = vpack.c.b16 %v559, %v557
    %v692 = vpack.c.b16 %v562, %v560
    %v693 = vpack.c.b16 %v563, %v561
    %v694 = vpack.c.b16 %v566, %v564
    %v695 = vpack.c.b16 %v567, %v565
    %824 = vmatprep.subr.bf16.mxu0 %v583
    %825 = vmatpush1.bf16.msra.mxu0 %v582
    %826 = vmatprep.subr.bf16.mxu0 %v581
    %827 = vmatpush1.bf16.msra.mxu0 %v580
    %828 = vmatprep.subr.bf16.mxu0 %v579
    %829 = vmatpush1.bf16.msra.mxu0 %v578
    %830 = vmatprep.subr.bf16.mxu0 %v577
    %831 = vmatpush1.bf16.msra.mxu0 %v576
    %832 = vmatprep.subr.bf16.mxu0 %v575
    %833 = vmatpush1.bf16.msra.mxu0 %v574
    %834 = vmatprep.subr.bf16.mxu0 %v573
    %835 = vmatpush1.bf16.msra.mxu0 %v572
    %836 = vmatprep.subr.bf16.mxu0 %v571
    %837 = vmatpush1.bf16.msra.mxu0 %v570
    %838 = vmatprep.subr.bf16.mxu0 %v569
    %839 = vmatpush1.bf16.msra.mxu0 %v568
    %840 = vmatprep.subr.bf16.mxu0 %v599
    %841 = vmatpush2.bf16.msra.mxu0 %v598
    %842 = vmatprep.subr.bf16.mxu0 %v597
    %843 = vmatpush2.bf16.msra.mxu0 %v596
    %844 = vmatprep.subr.bf16.mxu0 %v595
    %845 = vmatpush2.bf16.msra.mxu0 %v594
    %846 = vmatprep.subr.bf16.mxu0 %v593
    %847 = vmatpush2.bf16.msra.mxu0 %v592
    %848 = vmatprep.subr.bf16.mxu0 %v591
    %849 = vmatpush2.bf16.msra.mxu0 %v590
    %850 = vmatprep.subr.bf16.mxu0 %v589
    %851 = vmatpush2.bf16.msra.mxu0 %v588
    %852 = vmatprep.subr.bf16.mxu0 %v587
    %853 = vmatpush2.bf16.msra.mxu0 %v586
    %854 = vmatprep.subr.bf16.mxu0 %v585
    %855 = vmatpush2.bf16.msra.mxu0 %v584
    %856 = vmatprep.mubr.bf16.mxu0 %v49
    %857 = vmatmul.mubr.bf16.gmra.mxu0 %v48
    %v858 = vpop.f32.mrf.mxu0
    %v859 = vadd.f32 0.0, %v858
    %v860 = vpop.f32.mrf.mxu0
    %v861 = vadd.f32 0.0, %v860
    %v862 = vpop.f32.mrf.mxu0
    %v863 = vpop.f32.mrf.mxu0
    %864 = vdwg.mxu0
    %865 = vmatprep.subr.bf16.mxu0 %v615
    %866 = vmatpush1.bf16.msra.mxu0 %v614
    %867 = vmatprep.subr.bf16.mxu0 %v613
    %868 = vmatpush1.bf16.msra.mxu0 %v612
    %869 = vmatprep.subr.bf16.mxu0 %v611
    %870 = vmatpush1.bf16.msra.mxu0 %v610
    %871 = vmatprep.subr.bf16.mxu0 %v609
    %872 = vmatpush1.bf16.msra.mxu0 %v608
    %873 = vmatprep.subr.bf16.mxu0 %v607
    %874 = vmatpush1.bf16.msra.mxu0 %v606
    %875 = vmatprep.subr.bf16.mxu0 %v605
    %876 = vmatpush1.bf16.msra.mxu0 %v604
    %877 = vmatprep.subr.bf16.mxu0 %v603
    %878 = vmatpush1.bf16.msra.mxu0 %v602
    %879 = vmatprep.subr.bf16.mxu0 %v601
    %880 = vmatpush1.bf16.msra.mxu0 %v600
    %881 = vmatprep.subr.bf16.mxu0 %v631
    %882 = vmatpush2.bf16.msra.mxu0 %v630
    %883 = vmatprep.subr.bf16.mxu0 %v629
    %884 = vmatpush2.bf16.msra.mxu0 %v628
    %885 = vmatprep.subr.bf16.mxu0 %v627
    %886 = vmatpush2.bf16.msra.mxu0 %v626
    %887 = vmatprep.subr.bf16.mxu0 %v625
    %888 = vmatpush2.bf16.msra.mxu0 %v624
    %889 = vmatprep.subr.bf16.mxu0 %v623
    %890 = vmatpush2.bf16.msra.mxu0 %v622
    %891 = vmatprep.subr.bf16.mxu0 %v621
    %892 = vmatpush2.bf16.msra.mxu0 %v620
    %893 = vmatprep.subr.bf16.mxu0 %v619
    %894 = vmatpush2.bf16.msra.mxu0 %v618
    %895 = vmatprep.subr.bf16.mxu0 %v617
    %896 = vmatpush2.bf16.msra.mxu0 %v616
    %897 = vmatprep.mubr.bf16.mxu0 %v51
    %898 = vmatmul.mubr.bf16.gmra.mxu0 %v50
    %v899 = vpop.f32.mrf.mxu0
    %v900 = vadd.f32 %v859, %v899
    %v901 = vpop.f32.mrf.mxu0
    %v902 = vadd.f32 %v861, %v901
    %v903 = vpop.f32.mrf.mxu0
    %v904 = vpop.f32.mrf.mxu0
    %905 = vdwg.mxu0
    %906 = vmatprep.subr.bf16.mxu0 %v647
    %907 = vmatpush1.bf16.msra.mxu0 %v646
    %908 = vmatprep.subr.bf16.mxu0 %v645
    %909 = vmatpush1.bf16.msra.mxu0 %v644
    %910 = vmatprep.subr.bf16.mxu0 %v643
    %911 = vmatpush1.bf16.msra.mxu0 %v642
    %912 = vmatprep.subr.bf16.mxu0 %v641
    %913 = vmatpush1.bf16.msra.mxu0 %v640
    %914 = vmatprep.subr.bf16.mxu0 %v639
    %915 = vmatpush1.bf16.msra.mxu0 %v638
    %916 = vmatprep.subr.bf16.mxu0 %v637
    %917 = vmatpush1.bf16.msra.mxu0 %v636
    %918 = vmatprep.subr.bf16.mxu0 %v635
    %919 = vmatpush1.bf16.msra.mxu0 %v634
    %920 = vmatprep.subr.bf16.mxu0 %v633
    %921 = vmatpush1.bf16.msra.mxu0 %v632
    %922 = vmatprep.subr.bf16.mxu0 %v663
    %923 = vmatpush2.bf16.msra.mxu0 %v662
    %924 = vmatprep.subr.bf16.mxu0 %v661
    %925 = vmatpush2.bf16.msra.mxu0 %v660
    %926 = vmatprep.subr.bf16.mxu0 %v659
    %927 = vmatpush2.bf16.msra.mxu0 %v658
    %928 = vmatprep.subr.bf16.mxu0 %v657
    %929 = vmatpush2.bf16.msra.mxu0 %v656
    %930 = vmatprep.subr.bf16.mxu0 %v655
    %931 = vmatpush2.bf16.msra.mxu0 %v654
    %932 = vmatprep.subr.bf16.mxu0 %v653
    %933 = vmatpush2.bf16.msra.mxu0 %v652
    %934 = vmatprep.subr.bf16.mxu0 %v651
    %935 = vmatpush2.bf16.msra.mxu0 %v650
    %936 = vmatprep.subr.bf16.mxu0 %v649
    %937 = vmatpush2.bf16.msra.mxu0 %v648
    %938 = vmatprep.mubr.bf16.mxu0 %v53
    %939 = vmatmul.mubr.bf16.gmra.mxu0 %v52
    %v940 = vpop.f32.mrf.mxu0
    %v941 = vadd.f32 %v900, %v940
    %v942 = vpop.f32.mrf.mxu0
    %v943 = vadd.f32 %v902, %v942
    %v944 = vpop.f32.mrf.mxu0
    %v945 = vpop.f32.mrf.mxu0
    %946 = vdwg.mxu0
    %947 = vmatprep.subr.bf16.mxu0 %v679
    %948 = vmatpush1.bf16.msra.mxu0 %v678
    %949 = vmatprep.subr.bf16.mxu0 %v677
    %950 = vmatpush1.bf16.msra.mxu0 %v676
    %951 = vmatprep.subr.bf16.mxu0 %v675
    %952 = vmatpush1.bf16.msra.mxu0 %v674
    %953 = vmatprep.subr.bf16.mxu0 %v673
    %954 = vmatpush1.bf16.msra.mxu0 %v672
    %955 = vmatprep.subr.bf16.mxu0 %v671
    %956 = vmatpush1.bf16.msra.mxu0 %v670
    %957 = vmatprep.subr.bf16.mxu0 %v669
    %958 = vmatpush1.bf16.msra.mxu0 %v668
    %959 = vmatprep.subr.bf16.mxu0 %v667
    %960 = vmatpush1.bf16.msra.mxu0 %v666
    %961 = vmatprep.subr.bf16.mxu0 %v665
    %962 = vmatpush1.bf16.msra.mxu0 %v664
    %963 = vmatprep.subr.bf16.mxu0 %v695
    %964 = vmatpush2.bf16.msra.mxu0 %v694
    %965 = vmatprep.subr.bf16.mxu0 %v693
    %966 = vmatpush2.bf16.msra.mxu0 %v692
    %967 = vmatprep.subr.bf16.mxu0 %v691
    %968 = vmatpush2.bf16.msra.mxu0 %v690
    %969 = vmatprep.subr.bf16.mxu0 %v689
    %970 = vmatpush2.bf16.msra.mxu0 %v688
    %971 = vmatprep.subr.bf16.mxu0 %v687
    %972 = vmatpush2.bf16.msra.mxu0 %v686
    %973 = vmatprep.subr.bf16.mxu0 %v685
    %974 = vmatpush2.bf16.msra.mxu0 %v684
    %975 = vmatprep.subr.bf16.mxu0 %v683
    %976 = vmatpush2.bf16.msra.mxu0 %v682
    %977 = vmatprep.subr.bf16.mxu0 %v681
    %978 = vmatpush2.bf16.msra.mxu0 %v680
    %979 = vmatprep.mubr.bf16.mxu0 %v55
    %980 = vmatmul.mubr.bf16.gmra.mxu0 %v54
    %v981 = vpop.f32.mrf.mxu0
    %v982 = vadd.f32 %v941, %v981
    %v983 = vpop.f32.mrf.mxu0
    %v984 = vadd.f32 %v943, %v983
    %v985 = vpop.f32.mrf.mxu0
    %v986 = vpop.f32.mrf.mxu0
    %987 = vdwg.mxu0
    %v988 = vadd.f32 %v38, %v982
    %v989 = vadd.f32 %v39, %v984
    %990 = vst [vmem:[#allocation2] sm:$0xff] %v988
    %991 = vst [vmem:[#allocation2 + $0x8] sm:$0xff] %v989
    // Predicated region
    $region22: #{fast_rcnn_output_layers.1} parent=1 // pred_check
      %p992 = pneg %p32
    $region23: #{fast_rcnn_output_layers.1} parent=1 // pred_check_branch
      %994 = sbr.rel (%p992) target = $region25
    $region24: #{fast_rcnn_output_layers.1} parent=1 // pred_region
      %v995 = vld [vmem:[#allocation2] sm:$0xff]
      %v996 = vld [vmem:[#allocation2 + $0x8] sm:$0xff]
      %v997 = vld [vmem:[%s2] sm:$0x3]
      %v999 = vlaneseq
      %v1000 = vshrl.u32 %v999, 7
      %v1001 = vsub.s32 0, %v1000
      %v1002 = vrot.slane %v997, %v1001
      %v1003 = vlaneseq
      %v1004 = vshrl.u32 %v1003, 7
      %v1005 = vsub.s32 1, %v1004
      %v1006 = vrot.slane %v997, %v1005
      %v1009 = vadd.f32 %v995, %v1002
      %v1010 = vadd.f32 %v996, %v1006
      %vm1011 = vcmask 72704
      %1012 = vst.msk [vmem:[#allocation6] sm:$0xff] %vm1011, %v1009
      %vm1013 = vcmask 261120
      %1014 = vst.msk [vmem:[#allocation7] sm:$0xff] %vm1013, %v1010
    $region25: #{fast_rcnn_output_layers.1} parent=1 // pred_fallthru
      _
    // Predicated region
    $region26: #{fast_rcnn_output_layers.1} parent=1 // pred_check
      _
    $region27: #{fast_rcnn_output_layers.1} parent=1 // pred_check_branch
      %1016 = sbr.rel (0) target = $region29
    $region28: #{fast_rcnn_output_layers.1} parent=1 // pred_region
      %s1018 = ssub.s32 128, 128
      %1019 = vsyncadd [#allocation5], %s1018
      %s1021 = sshll.u32 [#allocation6], 4
      %s1022 = int_to_ptr.vmem [resolvable:$true] %s1021
      %1024 = dma.vmem_to_hbm [thread:$0]  %s1022, 128, %s3, [#allocation5]
    $region29: #{fast_rcnn_output_layers.1} parent=1 // pred_fallthru
      _
    // Predicated region
    $region30: #{fast_rcnn_output_layers.1} parent=1 // pred_check
      _
    $region31: #{fast_rcnn_output_layers.1} parent=1 // pred_check_branch
      %1026 = sbr.rel (0) target = $region33
    $region32: #{fast_rcnn_output_layers.1} parent=1 // pred_region
      %s1028 = ssub.s32 128, 128
      %1029 = vsyncadd [#allocation8], %s1028
      %s1031 = sshll.u32 [#allocation7], 4
      %s1032 = int_to_ptr.vmem [resolvable:$true] %s1031
      %1034 = dma.vmem_to_hbm [thread:$0]  %s1032, 128, %s4, [#allocation8]
    $region33: #{fast_rcnn_output_layers.1} parent=1 // pred_fallthru
      _
    // Predicated region
    $region34: #{fast_rcnn_output_layers.1} parent=1 // pred_check
      _
    $region35: #{fast_rcnn_output_layers.1} parent=1 // pred_check_branch
      %1036 = sbr.rel (0) target = $region37
    $region36: #{fast_rcnn_output_layers.1} parent=1 // pred_region
      %1037 = dma.done [#allocation5], 128
    $region37: #{fast_rcnn_output_layers.1} parent=1 // pred_fallthru
      _
    // Predicated region
    $region38: #{fast_rcnn_output_layers.1} parent=1 // pred_check
      _
    $region39: #{fast_rcnn_output_layers.1} parent=1 // pred_check_branch
      %1039 = sbr.rel (0) target = $region41
    $region40: #{fast_rcnn_output_layers.1} parent=1 // pred_region
      %1040 = dma.done [#allocation8], 128
    $region41: #{fast_rcnn_output_layers.1} parent=1 // pred_fallthru
      _
    %1041 = vsyncpa [#allocation4], 1
    %1042 = vsyncpa [#allocation5], 1
    %1043 = vsyncpa [#allocation8], 1

</llo_original>
